<compile_context>
chip_gen: v6e
topology: v6e:2x2x1
jax: 0.10.0
libtpu: 0.0.40
codegen_flags: <defaults>
</compile_context>

<pallas_src>
import functools

import numpy as np
import jax
import jax.numpy as jnp
from jax.experimental import pallas as pl
from jax.experimental.pallas import tpu as pltpu

LANE = 128
_SUBLANE = 8
_ELEMWISE_TILE_BYTES = 4 * 1024 * 1024   # per pipeline buffer, stride==1 path
_STRIDED_TILE_BYTES = 2 * 1024 * 1024    # per pipeline buffer, stride>1 path
_SEL_VMEM_BYTES = 2 * 1024 * 1024        # max VMEM for the one-hot selection matrix
_VMEM_LIMIT_BYTES = 32 * 1024 * 1024     # explicit: v5e scoped default is only 16 MiB


def _round_up(n, m):
    return ((n + m - 1) // m) * m


def _sublane(itemsize):
    # dtype-native sublane multiple: 8 rows (f32), 16 (bf16), 32 (int8/fp8).
    return _SUBLANE * max(1, 4 // itemsize)


def _pick_tile_rows(rows, lane_width, itemsize, target_bytes):
    """Rows per block: as large as the byte budget allows, but keep the grid at
    >= 2 steps whenever there is enough work (v7x has two TensorCores that each
    stream their own blocks; a grid of 1 would strand one of them)."""
    sub = _sublane(itemsize)
    by_bytes = max(sub, (target_bytes // (lane_width * itemsize)) // sub * sub)
    half = _round_up((rows + 1) // 2, sub)
    tile = min(by_bytes, max(sub, half))
    if tile >= rows:
        tile = rows   # one full-extent block (always a legal block shape)
    return int(tile)


# ---------------------------------------------------------------------------
# stride == 1 : pure elementwise streaming kernel
# ---------------------------------------------------------------------------
def _zero_elemwise_kernel(x_ref, o_ref):
    # Faithful to x.mul(0.0): NaN/Inf -> NaN, sign of the zero follows sign(x).
    o_ref[...] = x_ref[...] * jnp.zeros((), dtype=o_ref.dtype)


def _zero_dense(x):
    shape = x.shape
    dtype = x.dtype
    itemsize = jnp.dtype(dtype).itemsize
    total = int(np.prod(shape)) if shape else 1

    if total % LANE == 0:
        # Lane-dense (rows, 128) slab: unmasked full-width vld/vst, no lane
        # padding in VMEM.  The reshape of a contiguous array is free.
        rows, width = total // LANE, LANE
        x2 = x.reshape(rows, width)
    else:
        # Ragged fall-back: keep the natural trailing dim as the lane dim.
        # No jnp.pad / trailing-slice HBM round trips; the final partial block
        # is simply clipped by Pallas.
        width = shape[-1]
        x2 = x.reshape(-1, width)
        rows = x2.shape[0]

    lane_width = _round_up(width, LANE)   # VMEM lane footprint per row
    tile_rows = _pick_tile_rows(rows, lane_width, itemsize, _ELEMWISE_TILE_BYTES)
    grid = (pl.cdiv(rows, tile_rows),)

    out = pl.pallas_call(
        _zero_elemwise_kernel,
        out_shape=jax.ShapeDtypeStruct((rows, width), dtype),
        grid=grid,
        in_specs=[pl.BlockSpec((tile_rows, width), lambda i: (i, 0))],
        out_specs=pl.BlockSpec((tile_rows, width), lambda i: (i, 0)),
        compiler_params=pltpu.CompilerParams(
            dimension_semantics=("parallel",),
            vmem_limit_bytes=_VMEM_LIMIT_BYTES,
        ),
    )(x2)
    return out.reshape(shape)


# ---------------------------------------------------------------------------
# stride > 1 : fused strided-subsample + mul(0.0) kernel (no HBM temporaries)
# ---------------------------------------------------------------------------
def _zero_strided_kernel(x_ref, sel_ref, o_ref):
    # x_ref  : (tile_nc, H*W)         rows are (n, c) pairs, read contiguously
    # sel_ref: (H*W, H_out*W_out)     one-hot; column q marks source pixel p(q)
    # o_ref  : (tile_nc, H_out*W_out)
    x = x_ref[...].astype(jnp.float32)
    # x*0.0 can only be NaN (x is NaN/Inf), -0.0 (sign bit set) or +0.0.
    is_nan_out = jnp.isnan(x) | jnp.isinf(x)
    is_neg = pltpu.bitcast(x, jnp.int32) < 0           # IEEE sign bit (incl. -0.0)
    enc = jnp.where(is_nan_out, jnp.float32(2.0),
                    jnp.where(is_neg, jnp.float32(1.0), jnp.float32(0.0)))
    # One-hot compaction of the selected pixels.  Exact: per column a single
    # enc*1.0 term, every other term is (finite encoding)*0.0 == 0.0.
    picked = jnp.dot(enc, sel_ref[...], preferred_element_type=jnp.float32)
    out = jnp.where(picked >= 1.5, jnp.float32(jnp.nan),
                    jnp.where(picked >= 0.5, jnp.float32(-0.0), jnp.float32(0.0)))
    o_ref[...] = out.astype(o_ref.dtype)


def _zero_strided(x, stride):
    assert x.ndim == 4, "Zero with stride > 1 expects NCHW input"
    N, C, H, W = x.shape
    dtype = x.dtype
    itemsize = jnp.dtype(dtype).itemsize
    h_out = -(-H // stride)
    w_out = -(-W // stride)
    nc = N * C
    n_in, n_out = H * W, h_out * w_out

    if n_in * _round_up(n_out, LANE) * 4 > _SEL_VMEM_BYTES:
        # Very large spatial dims: the one-hot selection matrix would stop being
        # a negligible VMEM resident.  Fall back to materializing the slice once
        # and streaming it through the dense kernel (still correct).
        # TODO(synk): two-stage (sublane row-select + lane compaction) kernel so
        # large H*W also avoids the intermediate copy.
        return _zero_dense(x[:, :, ::stride, ::stride])

    # One-hot selection matrix, built once at trace time (tiny constant):
    # column q=(ho, wo) picks source pixel p = (ho*stride)*W + (wo*stride).
    q = np.arange(n_out)
    p_of_q = (q // w_out) * (stride * W) + (q % w_out) * stride
    sel = jnp.asarray(
        (np.arange(n_in)[:, None] == p_of_q[None, :]).astype(np.float32))

    x2 = x.reshape(nc, n_in)                   # free reshape; contiguous HBM reads
    in_lane = _round_up(n_in, LANE)            # VMEM lane footprint per row
    tile_nc = _pick_tile_rows(nc, in_lane, itemsize, _STRIDED_TILE_BYTES)
    grid = (pl.cdiv(nc, tile_nc),)

    out = pl.pallas_call(
        _zero_strided_kernel,
        out_shape=jax.ShapeDtypeStruct((nc, n_out), dtype),
        grid=grid,
        in_specs=[
            pl.BlockSpec((tile_nc, n_in), lambda i: (i, 0)),
            pl.BlockSpec((n_in, n_out), lambda i: (0, 0)),
        ],
        out_specs=pl.BlockSpec((tile_nc, n_out), lambda i: (i, 0)),
        compiler_params=pltpu.CompilerParams(
            dimension_semantics=("parallel",),
            vmem_limit_bytes=_VMEM_LIMIT_BYTES,
        ),
    )(x2, sel)
    return out.reshape(N, C, h_out, w_out)


@functools.partial(jax.jit, static_argnames=("stride",))
def zero_op(x, *, stride):
    """Pallas implementation of NDS `Zero(stride).forward(x)` for NCHW x."""
    if stride == 1:
        return _zero_dense(x)
    return _zero_strided(x, stride)


if __name__ == "__main__":
    key = jax.random.PRNGKey(0)
    N, C, H, W = 2, 4, 16, 16
    x = jax.random.normal(key, (N, C, H, W), dtype=jnp.float32)
    # Exercise the full x.mul(0.0) semantics: NaN / +-Inf -> NaN, and signed
    # zeros (the previous self-test never checked non-finite inputs).
    x = x.at[0, 0, 0, 0].set(jnp.nan)      # selected for stride 1 and 2
    x = x.at[0, 1, 2, 2].set(jnp.inf)      # selected for stride 1 and 2
    x = x.at[1, 2, 4, 6].set(-jnp.inf)     # selected for stride 1 and 2
    x = x.at[1, 3, 2, 4].set(-0.0)         # selected for stride 1 and 2
    x = x.at[1, 3, 3, 5].set(-0.0)         # selected for stride 1 only

    ok = True
    for stride in (1, 2):
        out = zero_op(x, stride=stride)
        jax.block_until_ready(out)

        # Pure-JAX reference of the PyTorch forward.
        x_sel = x if stride == 1 else x[:, :, ::stride, ::stride]
        ref = x_sel * 0.0

        ok &= (out.shape == ref.shape) and (out.dtype == ref.dtype)
        ref_nan = jnp.isnan(ref)
        # NaN positions must match exactly (NaN-aware comparison).
        ok &= bool(jnp.array_equal(jnp.isnan(out), ref_nan))
        # Non-NaN values must match exactly (they are all zeros).
        ok &= bool(jnp.all(jnp.where(ref_nan, 0.0, out)
                           == jnp.where(ref_nan, 0.0, ref)))
        # Signed-zero behaviour of mul(0.0) must match on the non-NaN entries.
        ok &= bool(jnp.all(jnp.where(ref_nan, True,
                                     jnp.signbit(out) == jnp.signbit(ref))))

    assert ok
    print("KERNEL_OK")
</pallas_src>

<mosaic_0001>
module attributes {stable_mosaic.version = 11 : i64} {
  func.func @_zero_elemwise_kernel(%arg0: i32, %arg1: memref<8x128xf32, #tpu.memory_space<vmem>>, %arg2: memref<8x128xf32, #tpu.memory_space<vmem>>) attributes {dimension_semantics = [#tpu.dimension_semantics<parallel>], iteration_bounds = array<i64: 2>, scalar_prefetch = 0 : i64, scratch_operands = 0 : i64, tpu.core_type = #tpu.core_type<tc>, window_params = [{transform_indices = @transform_0, window_bounds = array<i64: 8, 128>}, {transform_indices = @transform_1, window_bounds = array<i64: 8, 128>}]} {
    %c0 = arith.constant 0 : index
    %c0_0 = arith.constant 0 : index
    %0 = vector.load %arg1[%c0, %c0_0] : memref<8x128xf32, #tpu.memory_space<vmem>>, vector<8x128xf32>
    %cst = arith.constant 0.000000e+00 : f32
    %1 = vector.broadcast %cst : f32 to vector<8x128xf32>
    %2 = arith.mulf %0, %1 : vector<8x128xf32>
    %c0_1 = arith.constant 0 : index
    %c0_2 = arith.constant 0 : index
    %3 = vector.load %arg2[%c0_1, %c0_2] : memref<8x128xf32, #tpu.memory_space<vmem>>, vector<8x128xf32>
    tpu.vector_store %arg2[%c0_1, %c0_2], %2 {strides = array<i32>} : memref<8x128xf32, #tpu.memory_space<vmem>>, vector<8x128xf32>,
    return
  }
  func.func @transform_0(%arg0: i32) -> (i32, i32) {
    %c0_i32 = arith.constant 0 : i32
    %c0_i32_0 = arith.constant 0 : i32
    return %arg0, %c0_i32 : i32, i32
  }
  func.func @transform_1(%arg0: i32) -> (i32, i32) {
    %c0_i32 = arith.constant 0 : i32
    %c0_i32_0 = arith.constant 0 : i32
    return %arg0, %c0_i32 : i32, i32
  }
}

</mosaic_0001>

<llo_original>
// kernel: zero_op.1
$region0: #{zero_op.1}
  #allocation0 [shape = 'u32[]', space=smem, size = 0x4, offset = 0x4, fixed_abs, tag = 'smem constant byte address 0x4 - core index']
  #allocation1 [shape = 'u32[144,128]{1,0:T(1,128)}', space=vmem, size = 0x12000, scoped, tag = 'internal scratch']
  %s0 = inlined_call_operand.vmem [shape: f32[16,128], index: 0, kind: input, shape index: {}]
  %s1 = inlined_call_operand.vmem [shape: f32[16,128], index: 1, kind: output, shape index: {}]
  %s2 = sld [smem:[#allocation0]]
  $region37: #{zero_op.1} parent=0
    _
  %s4 = ssub.s32 1, %s2
  %s5 = scalar_select 0, %s4, %s2
  loop: start=0, step=1, limit=4
  $region2: #{zero_op.1} parent=0 // loop_pre_header
    _
  $region3: #{zero_op.1} parent=0 // loop_header
    %s7 = sphi 0, %s11
    %p8 = scmp.ge.s32.totalorder %s7, 4
    %s17 = sphi 0, %s19
    %s20 = sphi 0, %s17
    %s21 = sphi 0, %s20
    %s37 = sphi 0, %s21
    %s43 = sphi 0, %s45
    %s46 = sphi 0, %s43
    %s47 = sphi 0, %s46
    %s63 = sphi 0, %s47
  $region4: #{zero_op.1} parent=0 // loop_header_branch
    %10 = sbr.rel (%p8) target = $region8
  $region5: #{zero_op.1} parent=0 // loop_body
    %s12 = ssub.s32 %s7, 1
    %s13 = ssub.s32 %s7, 2
    %s14 = sadd.s32 %s7, 1
    %s15 = ssub.s32 %s7, %s14
    %p16 = scmp.eq.s32.totalorder %s15, 0
    %s18 = sadd.s32 %s17, 1
    %s19 = scalar_select %p16, %s17, %s18
    %p22 = pneg %p16
    %p23 = scmp.eq.s32.totalorder %s7, 1
    %p24 = por %p22, %p23
    %p25 = scmp.ne.s32.totalorder %s17, %s20
    %p26 = scmp.eq.s32.totalorder %s7, 0
    %p27 = por %p25, %p26
    %p28 = scmp.ne.s32.totalorder %s17, %s20
    %p29 = scmp.eq.s32.totalorder %s12, 1
    %p30 = por %p28, %p29
    %p31 = scmp.ne.s32.totalorder %s20, %s21
    %p32 = scmp.eq.s32.totalorder %s12, 0
    %p33 = por %p31, %p32
    %p34 = scmp.ne.s32.totalorder %s20, %s21
    %p35 = scmp.eq.s32.totalorder %s13, 1
    %p36 = por %p34, %p35
    %p38 = scmp.ne.s32.totalorder %s21, %s37
    %p39 = scmp.eq.s32.totalorder %s13, 0
    %p40 = por %p38, %p39
    %s41 = ssub.s32 %s7, %s14
    %p42 = scmp.eq.s32.totalorder %s41, 0
    %s44 = sadd.s32 %s43, 1
    %s45 = scalar_select %p42, %s43, %s44
    %p48 = pneg %p42
    %p49 = scmp.eq.s32.totalorder %s7, 1
    %p50 = por %p48, %p49
    %p51 = scmp.ne.s32.totalorder %s43, %s46
    %p52 = scmp.eq.s32.totalorder %s7, 0
    %p53 = por %p51, %p52
    %p54 = scmp.ne.s32.totalorder %s43, %s46
    %p55 = scmp.eq.s32.totalorder %s12, 1
    %p56 = por %p54, %p55
    %p57 = scmp.ne.s32.totalorder %s46, %s47
    %p58 = scmp.eq.s32.totalorder %s12, 0
    %p59 = por %p57, %p58
    %p60 = scmp.ne.s32.totalorder %s46, %s47
    %p61 = scmp.eq.s32.totalorder %s13, 1
    %p62 = por %p60, %p61
    %p64 = scmp.ne.s32.totalorder %s47, %s63
    %p65 = scmp.eq.s32.totalorder %s13, 0
    %p66 = por %p64, %p65
    %p67 = scmp.le.s32.totalorder 1, %s7
    %p68 = scmp.lt.s32.totalorder %s7, 3
    %p69 = pnand %p67, %p68
    %p70 = pneg %p69
    // Predicated region
    $region9: #{zero_op.1} parent=5 // pred_check
      _
    $region10: #{zero_op.1} parent=5 // pred_check_branch
      %72 = sbr.rel (%p69) target = $region12
    $region11: #{zero_op.1} parent=5 // pred_region
      %s73 = ssub.s32 %s7, 1
    $region12: #{zero_op.1} parent=5 // pred_fallthru
      _
    %p74 = scmp.lt.s32.totalorder %s7, 2
    // Predicated region
    $region13: #{zero_op.1} parent=5 // pred_check
      %p75 = pneg %p74
    $region14: #{zero_op.1} parent=5 // pred_check_branch
      %77 = sbr.rel (%p75) target = $region16
    $region15: #{zero_op.1} parent=5 // pred_region
      // Predicated region
      $region17: #{zero_op.1} parent=15 // pred_check
        %p78 = pneg %p27
      $region18: #{zero_op.1} parent=15 // pred_check_branch
        %80 = sbr.rel (%p78) target = $region20
      $region19: #{zero_op.1} parent=15 // pred_region
        %p81 = scmp.lt.s32.totalorder %s7, 1
        %s82 = scalar_select %p81, %s7, 1
        %s83 = smul.addr %s82, 8
        %s84 = scalar_lea.vmem %s0, %s83
      $region20: #{zero_op.1} parent=15 // pred_fallthru
        _
    $region16: #{zero_op.1} parent=5 // pred_fallthru
      _
    %p85 = scmp.le.s32.totalorder 1, %s7
    %p86 = scmp.lt.s32.totalorder %s7, 3
    %p87 = pnand %p85, %p86
    %p88 = pneg %p87
    // Predicated region
    $region21: #{zero_op.1} parent=5 // pred_check
      _
    $region22: #{zero_op.1} parent=5 // pred_check_branch
      %90 = sbr.rel (%p87) target = $region24
    $region23: #{zero_op.1} parent=5 // pred_region
      %s91 = ssub.s32 %s7, 1
      %p92 = scmp.lt.s32.totalorder %s12, 1
      %s93 = scalar_select %p92, %s12, 1
      %s94 = smul.addr %s93, 8
      %s95 = scalar_lea.vmem %s0, %s94
      %p96 = pneg %p33
      %p97 = pneg %p30
      %p98 = pneg %p59
      %p99 = pneg %p56
      %p100 = scmp.lt.s32.totalorder %s12, 1
      %s101 = scalar_select %p100, %s12, 1
      %s102 = smul.addr %s101, 8
      %s103 = scalar_lea.vmem %s1, %s102
      %p104 = scmp.lt.s32.totalorder %s12, 1
      %s105 = scalar_select %p104, %s12, 1
      %s106 = smul.addr %s105, 8
      %s107 = scalar_lea.vmem %s0, %s106
      %p108 = scmp.lt.s32.totalorder %s12, 1
      %s109 = scalar_select %p108, %s12, 1
      %s110 = smul.addr %s109, 8
      %s111 = scalar_lea.vmem %s1, %s110
      %v112 = vld [vmem:[%s107] sm:$0xff]
      %v113 = vmul.f32 %v112, 0.0
      %114 = vst [vmem:[%s111] sm:$0xff] %v113
      %p115 = scmp.lt.s32.totalorder %s12, 1
      %s116 = scalar_select %p115, %s12, 1
      %s117 = smul.addr %s116, 8
      %s118 = scalar_lea.vmem %s1, %s117
      // Predicated region
      $region25: #{zero_op.1} parent=23 // pred_check
        %p119 = pneg %p56
      $region26: #{zero_op.1} parent=23 // pred_check_branch
        %121 = sbr.rel (%p119) target = $region28
      $region27: #{zero_op.1} parent=23 // pred_region
        _
      $region28: #{zero_op.1} parent=23 // pred_fallthru
        _
    $region24: #{zero_op.1} parent=5 // pred_fallthru
      _
    %p122 = scmp.le.s32.totalorder 2, %s7
    // Predicated region
    $region29: #{zero_op.1} parent=5 // pred_check
      %p123 = pneg %p122
    $region30: #{zero_op.1} parent=5 // pred_check_branch
      %125 = sbr.rel (%p123) target = $region32
    $region31: #{zero_op.1} parent=5 // pred_region
      %s126 = ssub.s32 %s7, 2
      // Predicated region
      $region33: #{zero_op.1} parent=31 // pred_check
        %p127 = pneg %p62
      $region34: #{zero_op.1} parent=31 // pred_check_branch
        %129 = sbr.rel (%p127) target = $region36
      $region35: #{zero_op.1} parent=31 // pred_region
        %p130 = scmp.lt.s32.totalorder %s13, 1
        %s131 = scalar_select %p130, %s13, 1
        %s132 = smul.addr %s131, 8
        %s133 = scalar_lea.vmem %s1, %s132
      $region36: #{zero_op.1} parent=31 // pred_fallthru
        _
    $region32: #{zero_op.1} parent=5 // pred_fallthru
      _
  $region6: #{zero_op.1} parent=0 // loop_footer
    %s11 = sadd.s32 1, %s7
  $region7: #{zero_op.1} parent=0 // loop_footer_branch
    %6 = sbr.rel target = $region3
  $region8: #{zero_op.1} parent=0 // loop_exit
    _

</llo_original>
